<compile_context>
chip_gen: v6e
topology: v6e:2x2x1
jax: 0.10.0
libtpu: 0.0.40
codegen_flags: <defaults>
</compile_context>

<pallas_src>
import jax
import jax.numpy as jnp
from jax import lax
from jax.experimental import pallas as pl
from jax.experimental.pallas import tpu as pltpu


def _round_up(v: int, m: int) -> int:
    return ((v + m - 1) // m) * m


def _finalize_chunk_rows(d: int) -> int:
    """Row-chunk size for the finalize pass over the (D, D) Gram scratch.

    Chosen so every (td, D) f32 finalize temporary stays <= ~2 MiB, i.e. the
    epilogue never materializes a full (D, D) covariance temporary (important on
    v7x with only 64 MiB physical VMEM, and on v6e for very large D)."""
    max_elems = (2 * 1024 * 1024) // 4
    for td in (512, 256, 128, 64, 32, 16, 8):
        if d % td == 0 and td * d <= max_elems:
            return td
    return d  # no nice divisor: single pass (correct; only matters for odd D)


def _make_vicreg_kernel(n_rows: int, d_cols: int, var_coeff: float,
                        inv_coeff: float, cov_coeff: float, gamma: float,
                        mxu_dtype):
    n_f = float(n_rows)
    d_f = float(d_cols)
    td = _finalize_chunk_rows(d_cols)
    n_chunks = d_cols // td if (d_cols % td == 0) else 1
    if d_cols % td != 0:
        td = d_cols

    contract0 = (((0,), (0,)), ((), ()))   # contract axis 0 of both operands

    def kernel(x_ref, y_ref, out_ref, gram_x, gram_y, cs_x, cs_y, dsq):
        i = pl.program_id(0)

        @pl.when(i == 0)
        def _init():
            gram_x[...] = jnp.zeros_like(gram_x)
            gram_y[...] = jnp.zeros_like(gram_y)
            cs_x[...] = jnp.zeros_like(cs_x)
            cs_y[...] = jnp.zeros_like(cs_y)
            dsq[...] = jnp.zeros_like(dsq)

        x = x_ref[...]                      # (TN, D)
        y = y_ref[...]
        # Optional bf16 cast of the MXU operands only (f32 accumulation kept).
        xm = x if mxu_dtype is None else x.astype(mxu_dtype)
        ym = y if mxu_dtype is None else y.astype(mxu_dtype)

        # Gram accumulation on the MXU: dot_general contracting axis 0 of both
        # operands computes x^T x without materializing a transpose (Mosaic
        # lowers this straight to the MXU; no per-tile XLU pass).
        gram_x[...] += lax.dot_general(xm, xm, contract0,
                                       preferred_element_type=jnp.float32)
        gram_y[...] += lax.dot_general(ym, ym, contract0,
                                       preferred_element_type=jnp.float32)

        # Small f32 per-column statistics on the VPU (filler under the MXU work).
        xf = x.astype(jnp.float32)
        yf = y.astype(jnp.float32)
        cs_x[...] += jnp.sum(xf, axis=0, keepdims=True)
        cs_y[...] += jnp.sum(yf, axis=0, keepdims=True)
        diff = xf - yf
        dsq[...] += jnp.sum(diff * diff, axis=0, keepdims=True)

        @pl.when(i == pl.num_programs(0) - 1)
        def _finalize():
            inv_n = 1.0 / n_f
            inv_nm1 = 1.0 / (n_f - 1.0)   # n == 1 -> inf/nan, matching torch

            def branch(gram_ref, cs_ref):
                s = cs_ref[...]                     # (1, D) column sums
                mean = s * inv_n                    # (1, D)

                def chunk(c, carry):
                    cov_sq, var_sq, v_sum = carry
                    r0 = pl.multiple_of(c * td, td)
                    g = gram_ref[pl.ds(r0, td), :]  # (td, D) rows of the Gram
                    rows = lax.broadcasted_iota(jnp.int32, (td, d_cols), 0)
                    cols = lax.broadcasted_iota(jnp.int32, (td, d_cols), 1)
                    diag_mask = (rows + r0) == cols
                    # Column-oriented slice of s for these rows, extracted via
                    # the shifted-diagonal mask: no per-tile matvec, no transpose.
                    s_bc = jnp.broadcast_to(s, (td, d_cols))
                    s_col = jnp.sum(jnp.where(diag_mask, s_bc, jnp.float32(0.0)),
                                    axis=1, keepdims=True)          # (td, 1)
                    # cov rows: (Z^T Z - s s^T / n) / (n - 1)
                    cov = (g - s_col * mean) * inv_nm1               # (td, D)
                    cov_sq = cov_sq + jnp.sum(cov * cov)
                    # diag(cov) for columns [r0, r0+td) == unbiased per-column
                    # variance; same fp values as in cov_sq -> exact cancellation
                    # of the fill_diagonal_(0) term.
                    var = jnp.sum(jnp.where(diag_mask, cov, jnp.float32(0.0)),
                                  axis=1, keepdims=True)             # (td, 1)
                    var_sq = var_sq + jnp.sum(var * var)
                    std = jnp.sqrt(jnp.maximum(var, 0.0))
                    v_sum = v_sum + jnp.sum(jnp.maximum(gamma - std, 0.0))
                    return cov_sq, var_sq, v_sum

                zero = jnp.float32(0.0)
                cov_sq, var_sq, v_sum = lax.fori_loop(
                    0, n_chunks, chunk, (zero, zero, zero))
                v_l = v_sum * (1.0 / d_f)
                c_l = (cov_sq - var_sq) * (1.0 / d_f)
                return v_l, c_l

            vx, cx = branch(gram_x, cs_x)
            vy, cy = branch(gram_y, cs_y)
            var_l = 0.5 * (vx + vy)
            cov_l = 0.5 * (cx + cy)
            inv_l = jnp.sum(dsq[...]) * (inv_n * (1.0 / d_f))
            out_ref[0, 0] = (var_coeff * var_l
                             + inv_coeff * inv_l
                             + cov_coeff * cov_l)

    return kernel


def vicreg_loss_pallas(x, y, *, var_coeff=1.0, inv_coeff=1.0, cov_coeff=1e-5,
                       gamma=1.0, tile_n=None, mxu_dtype=None):
    assert x.shape == y.shape and x.ndim == 2, "expected (batch, dim) inputs"
    n, d = x.shape
    itemsize = jnp.dtype(x.dtype).itemsize

    # Generation-aware VMEM budget: 128 MiB on v5e/v6e, 64 MiB on v7x.
    try:
        vmem_cap = int(getattr(pltpu.get_tpu_info(), "vmem_capacity_bytes"))
    except Exception:
        vmem_cap = 64 * 1024 * 1024            # conservative (v7x) fallback
    vmem_target = max(vmem_cap - 6 * 1024 * 1024, 32 * 1024 * 1024)

    gram_bytes = 2 * d * d * 4                 # resident f32 Gram accumulators
    small_scratch = 3 * 8 * max(d, 128) * 4    # padded (1, D) stats
    fin_rows = _finalize_chunk_rows(d)
    finalize_headroom = 4 * fin_rows * max(d, 128) * 4   # chunked epilogue temps

    if tile_n is None:
        # Size the streaming tiles from what is left after the resident Grams.
        stream_budget = vmem_target - gram_bytes - small_scratch - finalize_headroom
        stream_budget = max(2 * 1024 * 1024, stream_budget)
        max_rows = stream_budget // max(1, 4 * d * itemsize)   # 2 inputs x 2 buffers
        tile_n = int(min(1024, max(128, max_rows)))

    # tile_n is the MXU contraction depth K: align to 128; never below the dtype
    # sublane pack (f32: 8, bf16: 16, int8: 32); don't exceed the padded batch.
    pack = {4: 8, 2: 16, 1: 32}.get(itemsize, 8)
    tile_n = max(1, int(tile_n))
    tile_n = min(tile_n, _round_up(n, 128))
    if tile_n >= 128:
        tile_n = (tile_n // 128) * 128
    else:
        tile_n = max(pack, _round_up(tile_n, pack))

    # Zero-pad the batch to a multiple of tile_n (zero rows are exact no-ops for
    # every accumulator; the true n is baked into the finalize step).
    n_pad = _round_up(n, tile_n)
    if n_pad != n:
        x = jnp.pad(x, ((0, n_pad - n), (0, 0)))
        y = jnp.pad(y, ((0, n_pad - n), (0, 0)))
    num_tiles = n_pad // tile_n

    kernel = _make_vicreg_kernel(n, d, float(var_coeff), float(inv_coeff),
                                 float(cov_coeff), float(gamma), mxu_dtype)

    grid_spec = pltpu.PrefetchScalarGridSpec(
        num_scalar_prefetch=0,
        grid=(num_tiles,),
        in_specs=[
            pl.BlockSpec((tile_n, d), lambda i: (i, 0)),
            pl.BlockSpec((tile_n, d), lambda i: (i, 0)),
        ],
        out_specs=pl.BlockSpec(memory_space=pltpu.SMEM),
        scratch_shapes=[
            pltpu.VMEM((d, d), jnp.float32),   # Gram_x
            pltpu.VMEM((d, d), jnp.float32),   # Gram_y
            pltpu.VMEM((1, d), jnp.float32),   # colsum_x
            pltpu.VMEM((1, d), jnp.float32),   # colsum_y
            pltpu.VMEM((1, d), jnp.float32),   # per-column sum((x-y)^2)
        ],
    )

    stream_bytes = 2 * 2 * tile_n * d * itemsize   # double-buffered x/y tiles
    vmem_needed = (stream_bytes + gram_bytes + small_scratch
                   + finalize_headroom + (2 << 20))
    vmem_limit = int(min(vmem_target, max(vmem_needed, 32 * 1024 * 1024)))

    cost = pl.CostEstimate(
        flops=int(4 * n_pad * d * d + 6 * n_pad * d),
        transcendentals=int(2 * d),
        bytes_accessed=int(2 * n_pad * d * itemsize + 4),
    )

    out = pl.pallas_call(
        kernel,
        out_shape=jax.ShapeDtypeStruct((1, 1), jnp.float32),
        grid_spec=grid_spec,
        compiler_params=pltpu.CompilerParams(
            dimension_semantics=("arbitrary",),
            vmem_limit_bytes=vmem_limit,
        ),
        cost_estimate=cost,
    )(x, y)
    return out[0, 0]


def vicreg_loss_ref(x, y, *, var_coeff=1.0, inv_coeff=1.0, cov_coeff=1e-5, gamma=1.0):
    """Pure-JAX reference mirroring the PyTorch module."""
    x = x.astype(jnp.float32)
    y = y.astype(jnp.float32)
    n, d = x.shape

    def var_l(z):
        zc = z - z.mean(axis=0)
        std = jnp.sqrt(jnp.sum(zc * zc, axis=0) / (n - 1))
        return jnp.mean(jax.nn.relu(gamma - std))

    def cov_l(z):
        zc = z - z.mean(axis=0)
        cov = zc.T @ zc / (n - 1)
        cov = cov * (1.0 - jnp.eye(d, dtype=jnp.float32))
        return jnp.sum(cov ** 2) / d

    variance = (var_l(x) + var_l(y)) / 2
    invariance = jnp.mean((x - y) ** 2)
    covariance = (cov_l(x) + cov_l(y)) / 2
    return var_coeff * variance + inv_coeff * invariance + cov_coeff * covariance


if __name__ == "__main__":
    key = jax.random.PRNGKey(0)
    kx, ky = jax.random.split(key)

    # Small shapes consistent with the module: (batch, embedding_dim).
    N, D = 8, 32
    x = jax.random.normal(kx, (N, D), dtype=jnp.float32)
    y = jax.random.normal(ky, (N, D), dtype=jnp.float32)
    loss = jax.block_until_ready(vicreg_loss_pallas(x, y))
    ref = jax.block_until_ready(vicreg_loss_ref(x, y))
    assert jnp.allclose(loss, ref, rtol=1e-4, atol=1e-5), (loss, ref)

    # Exercise the streaming (multi-tile) + batch-padding path.
    N2, D2 = 40, 32
    k2x, k2y = jax.random.split(jax.random.PRNGKey(1))
    x2 = jax.random.normal(k2x, (N2, D2), dtype=jnp.float32)
    y2 = jax.random.normal(k2y, (N2, D2), dtype=jnp.float32)
    loss2 = jax.block_until_ready(vicreg_loss_pallas(x2, y2, tile_n=16))
    ref2 = jax.block_until_ready(vicreg_loss_ref(x2, y2))
    assert jnp.allclose(loss2, ref2, rtol=1e-4, atol=1e-5), (loss2, ref2)

    # Exercise the opt-in bf16 MXU path (f32 stats kept; loose tolerance).
    loss3 = jax.block_until_ready(
        vicreg_loss_pallas(x2, y2, tile_n=16, mxu_dtype=jnp.bfloat16))
    assert jnp.allclose(loss3, ref2, rtol=5e-2, atol=1e-2), (loss3, ref2)

    print("KERNEL_OK")
</pallas_src>

<mosaic_0001>
module attributes {stable_mosaic.version = 11 : i64} {
  func.func @kernel(%arg0: i32, %arg1: memref<128x32xf32, #tpu.memory_space<vmem>>, %arg2: memref<128x32xf32, #tpu.memory_space<vmem>>, %arg3: memref<1x1xf32, #tpu.memory_space<smem>>, %arg4: memref<32x32xf32, #tpu.memory_space<vmem>>, %arg5: memref<32x32xf32, #tpu.memory_space<vmem>>, %arg6: memref<1x32xf32, #tpu.memory_space<vmem>>, %arg7: memref<1x32xf32, #tpu.memory_space<vmem>>, %arg8: memref<1x32xf32, #tpu.memory_space<vmem>>) attributes {dimension_semantics = [#tpu.dimension_semantics<arbitrary>], iteration_bounds = array<i64: 1>, scalar_prefetch = 0 : i64, scratch_operands = 5 : i64, tpu.core_type = #tpu.core_type<tc>, window_params = [{transform_indices = @transform_0, window_bounds = array<i64: 128, 32>}, {transform_indices = @transform_1, window_bounds = array<i64: 128, 32>}, {transform_indices = @transform_2, window_bounds = array<i64: 1, 1>}]} {
    %c0_i32 = arith.constant 0 : i32
    %0 = arith.cmpi eq, %arg0, %c0_i32 : i32
    %1 = arith.extui %0 : i1 to i32
    %c0_i32_0 = arith.constant 0 : i32
    %2 = arith.cmpi ne, %1, %c0_i32_0 : i32
    scf.if %2 {
      %cst_30 = arith.constant 0.000000e+00 : f32
      %33 = vector.broadcast %cst_30 : f32 to vector<32x32xf32>
      %c0_31 = arith.constant 0 : index
      %c0_32 = arith.constant 0 : index
      %34 = vector.load %arg4[%c0_31, %c0_32] : memref<32x32xf32, #tpu.memory_space<vmem>>, vector<32x32xf32>
      tpu.vector_store %arg4[%c0_31, %c0_32], %33 {strides = array<i32>} : memref<32x32xf32, #tpu.memory_space<vmem>>, vector<32x32xf32>,
      %cst_33 = arith.constant 0.000000e+00 : f32
      %35 = vector.broadcast %cst_33 : f32 to vector<32x32xf32>
      %c0_34 = arith.constant 0 : index
      %c0_35 = arith.constant 0 : index
      %36 = vector.load %arg5[%c0_34, %c0_35] : memref<32x32xf32, #tpu.memory_space<vmem>>, vector<32x32xf32>
      tpu.vector_store %arg5[%c0_34, %c0_35], %35 {strides = array<i32>} : memref<32x32xf32, #tpu.memory_space<vmem>>, vector<32x32xf32>,
      %cst_36 = arith.constant 0.000000e+00 : f32
      %37 = vector.broadcast %cst_36 : f32 to vector<1x32xf32>
      %c0_37 = arith.constant 0 : index
      %c0_38 = arith.constant 0 : index
      %38 = vector.load %arg6[%c0_37, %c0_38] : memref<1x32xf32, #tpu.memory_space<vmem>>, vector<1x32xf32>
      tpu.vector_store %arg6[%c0_37, %c0_38], %37 {strides = array<i32>} : memref<1x32xf32, #tpu.memory_space<vmem>>, vector<1x32xf32>,
      %cst_39 = arith.constant 0.000000e+00 : f32
      %39 = vector.broadcast %cst_39 : f32 to vector<1x32xf32>
      %c0_40 = arith.constant 0 : index
      %c0_41 = arith.constant 0 : index
      %40 = vector.load %arg7[%c0_40, %c0_41] : memref<1x32xf32, #tpu.memory_space<vmem>>, vector<1x32xf32>
      tpu.vector_store %arg7[%c0_40, %c0_41], %39 {strides = array<i32>} : memref<1x32xf32, #tpu.memory_space<vmem>>, vector<1x32xf32>,
      %cst_42 = arith.constant 0.000000e+00 : f32
      %41 = vector.broadcast %cst_42 : f32 to vector<1x32xf32>
      %c0_43 = arith.constant 0 : index
      %c0_44 = arith.constant 0 : index
      %42 = vector.load %arg8[%c0_43, %c0_44] : memref<1x32xf32, #tpu.memory_space<vmem>>, vector<1x32xf32>
      tpu.vector_store %arg8[%c0_43, %c0_44], %41 {strides = array<i32>} : memref<1x32xf32, #tpu.memory_space<vmem>>, vector<1x32xf32>,
    } else {
    }
    %c0 = arith.constant 0 : index
    %c0_1 = arith.constant 0 : index
    %3 = vector.load %arg1[%c0, %c0_1] : memref<128x32xf32, #tpu.memory_space<vmem>>, vector<128x32xf32>
    %c0_2 = arith.constant 0 : index
    %c0_3 = arith.constant 0 : index
    %4 = vector.load %arg2[%c0_2, %c0_3] : memref<128x32xf32, #tpu.memory_space<vmem>>, vector<128x32xf32>
    %c0_4 = arith.constant 0 : index
    %c0_5 = arith.constant 0 : index
    %5 = vector.load %arg4[%c0_4, %c0_5] : memref<32x32xf32, #tpu.memory_space<vmem>>, vector<32x32xf32>
    %cst = arith.constant dense<0.000000e+00> : vector<32x32xf32>
    %6 = tpu.matmul %3, %3, %cst {dimension_numbers = #tpu.dot_dimension_numbers<[0], [0], [1], [1], [0, 1, 1, 1], [], []>} : vector<128x32xf32>, vector<128x32xf32>, vector<32x32xf32> -> vector<32x32xf32>
    %7 = arith.addf %5, %6 : vector<32x32xf32>
    %c0_6 = arith.constant 0 : index
    %c0_7 = arith.constant 0 : index
    %8 = vector.load %arg4[%c0_6, %c0_7] : memref<32x32xf32, #tpu.memory_space<vmem>>, vector<32x32xf32>
    tpu.vector_store %arg4[%c0_6, %c0_7], %7 {strides = array<i32>} : memref<32x32xf32, #tpu.memory_space<vmem>>, vector<32x32xf32>,
    %c0_8 = arith.constant 0 : index
    %c0_9 = arith.constant 0 : index
    %9 = vector.load %arg5[%c0_8, %c0_9] : memref<32x32xf32, #tpu.memory_space<vmem>>, vector<32x32xf32>
    %cst_10 = arith.constant dense<0.000000e+00> : vector<32x32xf32>
    %10 = tpu.matmul %4, %4, %cst_10 {dimension_numbers = #tpu.dot_dimension_numbers<[0], [0], [1], [1], [0, 1, 1, 1], [], []>} : vector<128x32xf32>, vector<128x32xf32>, vector<32x32xf32> -> vector<32x32xf32>
    %11 = arith.addf %9, %10 : vector<32x32xf32>
    %c0_11 = arith.constant 0 : index
    %c0_12 = arith.constant 0 : index
    %12 = vector.load %arg5[%c0_11, %c0_12] : memref<32x32xf32, #tpu.memory_space<vmem>>, vector<32x32xf32>
    tpu.vector_store %arg5[%c0_11, %c0_12], %11 {strides = array<i32>} : memref<32x32xf32, #tpu.memory_space<vmem>>, vector<32x32xf32>,
    %c0_13 = arith.constant 0 : index
    %c0_14 = arith.constant 0 : index
    %13 = vector.load %arg6[%c0_13, %c0_14] : memref<1x32xf32, #tpu.memory_space<vmem>>, vector<1x32xf32>
    %cst_15 = arith.constant dense<0.000000e+00> : vector<32xf32>
    %14 = vector.multi_reduction <add>, %3, %cst_15 [0] : vector<128x32xf32> to vector<32xf32>
    %15 = vector.shape_cast %14 : vector<32xf32> to vector<1x32xf32>
    %16 = arith.addf %13, %15 : vector<1x32xf32>
    %c0_16 = arith.constant 0 : index
    %c0_17 = arith.constant 0 : index
    %17 = vector.load %arg6[%c0_16, %c0_17] : memref<1x32xf32, #tpu.memory_space<vmem>>, vector<1x32xf32>
    tpu.vector_store %arg6[%c0_16, %c0_17], %16 {strides = array<i32>} : memref<1x32xf32, #tpu.memory_space<vmem>>, vector<1x32xf32>,
    %c0_18 = arith.constant 0 : index
    %c0_19 = arith.constant 0 : index
    %18 = vector.load %arg7[%c0_18, %c0_19] : memref<1x32xf32, #tpu.memory_space<vmem>>, vector<1x32xf32>
    %cst_20 = arith.constant dense<0.000000e+00> : vector<32xf32>
    %19 = vector.multi_reduction <add>, %4, %cst_20 [0] : vector<128x32xf32> to vector<32xf32>
    %20 = vector.shape_cast %19 : vector<32xf32> to vector<1x32xf32>
    %21 = arith.addf %18, %20 : vector<1x32xf32>
    %c0_21 = arith.constant 0 : index
    %c0_22 = arith.constant 0 : index
    %22 = vector.load %arg7[%c0_21, %c0_22] : memref<1x32xf32, #tpu.memory_space<vmem>>, vector<1x32xf32>
    tpu.vector_store %arg7[%c0_21, %c0_22], %21 {strides = array<i32>} : memref<1x32xf32, #tpu.memory_space<vmem>>, vector<1x32xf32>,
    %23 = arith.subf %3, %4 : vector<128x32xf32>
    %c0_23 = arith.constant 0 : index
    %c0_24 = arith.constant 0 : index
    %24 = vector.load %arg8[%c0_23, %c0_24] : memref<1x32xf32, #tpu.memory_space<vmem>>, vector<1x32xf32>
    %25 = arith.mulf %23, %23 : vector<128x32xf32>
    %cst_25 = arith.constant dense<0.000000e+00> : vector<32xf32>
    %26 = vector.multi_reduction <add>, %25, %cst_25 [0] : vector<128x32xf32> to vector<32xf32>
    %27 = vector.shape_cast %26 : vector<32xf32> to vector<1x32xf32>
    %28 = arith.addf %24, %27 : vector<1x32xf32>
    %c0_26 = arith.constant 0 : index
    %c0_27 = arith.constant 0 : index
    %29 = vector.load %arg8[%c0_26, %c0_27] : memref<1x32xf32, #tpu.memory_space<vmem>>, vector<1x32xf32>
    tpu.vector_store %arg8[%c0_26, %c0_27], %28 {strides = array<i32>} : memref<1x32xf32, #tpu.memory_space<vmem>>, vector<1x32xf32>,
    %c0_i32_28 = arith.constant 0 : i32
    %30 = arith.cmpi eq, %arg0, %c0_i32_28 : i32
    %31 = arith.extui %30 : i1 to i32
    %c0_i32_29 = arith.constant 0 : i32
    %32 = arith.cmpi ne, %31, %c0_i32_29 : i32
    scf.if %32 {
      %c0_30 = arith.constant 0 : index
      %c0_31 = arith.constant 0 : index
      %33 = vector.load %arg6[%c0_30, %c0_31] : memref<1x32xf32, #tpu.memory_space<vmem>>, vector<1x32xf32>
      %cst_32 = arith.constant 1.250000e-01 : f32
      %34 = vector.broadcast %cst_32 : f32 to vector<1x32xf32>
      %35 = arith.mulf %33, %34 : vector<1x32xf32>
      %cst_33 = arith.constant 0.000000e+00 : f32
      %cst_34 = arith.constant 0.000000e+00 : f32
      %cst_35 = arith.constant 0.000000e+00 : f32
      %c0_i32_36 = arith.constant 0 : i32
      %c32_i32 = arith.constant 32 : i32
      %36 = arith.muli %c0_i32_36, %c32_i32 : i32
      %37 = tpu.assume_multiple %36, 32 : i32
      %38 = arith.index_cast %37 : i32 to index
      %c0_37 = arith.constant 0 : index
      %39 = vector.load %arg4[%38, %c0_37] : memref<32x32xf32, #tpu.memory_space<vmem>>, vector<32x32xf32>
      %40 = tpu.iota {dimensions = array<i32: 0>} : vector<32x32xi32>
      %41 = tpu.iota {dimensions = array<i32: 1>} : vector<32x32xi32>
      %42 = vector.broadcast %37 : i32 to vector<32x32xi32>
      %43 = arith.addi %40, %42 : vector<32x32xi32>
      %44 = arith.cmpi eq, %43, %41 : vector<32x32xi32>
      %45 = vector.shape_cast %33 : vector<1x32xf32> to vector<1x32xf32>
      %46 = vector.broadcast %45 : vector<1x32xf32> to vector<32x32xf32>
      %cst_38 = arith.constant 0.000000e+00 : f32
      %47 = vector.broadcast %cst_38 : f32 to vector<32x32xf32>
      %48 = arith.select %44, %46, %47 : vector<32x32xi1>, vector<32x32xf32>
      %cst_39 = arith.constant dense<0.000000e+00> : vector<32xf32>
      %49 = vector.multi_reduction <add>, %48, %cst_39 [1] : vector<32x32xf32> to vector<32xf32>
      %50 = vector.shape_cast %49 : vector<32xf32> to vector<32x1xf32>
      %51 = vector.broadcast %50 : vector<32x1xf32> to vector<32x32xf32>
      %52 = vector.broadcast %35 : vector<1x32xf32> to vector<32x32xf32>
      %53 = arith.mulf %51, %52 : vector<32x32xf32>
      %54 = arith.subf %39, %53 : vector<32x32xf32>
      %cst_40 = arith.constant 0.142857149 : f32
      %55 = vector.broadcast %cst_40 : f32 to vector<32x32xf32>
      %56 = arith.mulf %54, %55 : vector<32x32xf32>
      %57 = arith.mulf %56, %56 : vector<32x32xf32>
      %58 = vector.shape_cast %57 : vector<32x32xf32> to vector<1x32x32xf32>
      %cst_41 = arith.constant dense<0.000000e+00> : vector<1xf32>
      %59 = vector.multi_reduction <add>, %58, %cst_41 [1, 2] : vector<1x32x32xf32> to vector<1xf32>
      %60 = vector.shape_cast %59 : vector<1xf32> to vector<1x1x1xf32>
      %61 = vector.extract %60[0, 0, 0] : f32 from vector<1x1x1xf32>
      %62 = arith.addf %cst_33, %61 : f32
      %cst_42 = arith.constant 0.000000e+00 : f32
      %63 = vector.broadcast %cst_42 : f32 to vector<32x32xf32>
      %64 = arith.select %44, %56, %63 : vector<32x32xi1>, vector<32x32xf32>
      %cst_43 = arith.constant dense<0.000000e+00> : vector<32xf32>
      %65 = vector.multi_reduction <add>, %64, %cst_43 [1] : vector<32x32xf32> to vector<32xf32>
      %66 = vector.shape_cast %65 : vector<32xf32> to vector<32x1xf32>
      %67 = arith.mulf %66, %66 : vector<32x1xf32>
      %68 = vector.shape_cast %67 : vector<32x1xf32> to vector<1x32x1xf32>
      %cst_44 = arith.constant dense<0.000000e+00> : vector<1xf32>
      %69 = vector.multi_reduction <add>, %68, %cst_44 [1, 2] : vector<1x32x1xf32> to vector<1xf32>
      %70 = vector.shape_cast %69 : vector<1xf32> to vector<1x1x1xf32>
      %71 = vector.extract %70[0, 0, 0] : f32 from vector<1x1x1xf32>
      %72 = arith.addf %cst_34, %71 : f32
      %cst_45 = arith.constant 0.000000e+00 : f32
      %73 = vector.broadcast %cst_45 : f32 to vector<32x1xf32>
      %74 = arith.maximumf %66, %73 : vector<32x1xf32>
      %75 = math.sqrt %74 : vector<32x1xf32>
      %cst_46 = arith.constant 1.000000e+00 : f32
      %76 = vector.broadcast %cst_46 : f32 to vector<32x1xf32>
      %77 = arith.subf %76, %75 : vector<32x1xf32>
      %cst_47 = arith.constant 0.000000e+00 : f32
      %78 = vector.broadcast %cst_47 : f32 to vector<32x1xf32>
      %79 = arith.maximumf %77, %78 : vector<32x1xf32>
      %80 = vector.shape_cast %79 : vector<32x1xf32> to vector<1x32x1xf32>
      %cst_48 = arith.constant dense<0.000000e+00> : vector<1xf32>
      %81 = vector.multi_reduction <add>, %80, %cst_48 [1, 2] : vector<1x32x1xf32> to vector<1xf32>
      %82 = vector.shape_cast %81 : vector<1xf32> to vector<1x1x1xf32>
      %83 = vector.extract %82[0, 0, 0] : f32 from vector<1x1x1xf32>
      %84 = arith.addf %cst_35, %83 : f32
      %c1_i32 = arith.constant 1 : i32
      %cst_49 = arith.constant 3.125000e-02 : f32
      %85 = arith.mulf %84, %cst_49 : f32
      %86 = arith.subf %62, %72 : f32
      %cst_50 = arith.constant 3.125000e-02 : f32
      %87 = arith.mulf %86, %cst_50 : f32
      %c0_51 = arith.constant 0 : index
      %c0_52 = arith.constant 0 : index
      %88 = vector.load %arg7[%c0_51, %c0_52] : memref<1x32xf32, #tpu.memory_space<vmem>>, vector<1x32xf32>
      %cst_53 = arith.constant 1.250000e-01 : f32
      %89 = vector.broadcast %cst_53 : f32 to vector<1x32xf32>
      %90 = arith.mulf %88, %89 : vector<1x32xf32>
      %cst_54 = arith.constant 0.000000e+00 : f32
      %cst_55 = arith.constant 0.000000e+00 : f32
      %cst_56 = arith.constant 0.000000e+00 : f32
      %c0_i32_57 = arith.constant 0 : i32
      %c32_i32_58 = arith.constant 32 : i32
      %91 = arith.muli %c0_i32_57, %c32_i32_58 : i32
      %92 = tpu.assume_multiple %91, 32 : i32
      %93 = arith.index_cast %92 : i32 to index
      %c0_59 = arith.constant 0 : index
      %94 = vector.load %arg5[%93, %c0_59] : memref<32x32xf32, #tpu.memory_space<vmem>>, vector<32x32xf32>
      %95 = tpu.iota {dimensions = array<i32: 0>} : vector<32x32xi32>
      %96 = tpu.iota {dimensions = array<i32: 1>} : vector<32x32xi32>
      %97 = vector.broadcast %92 : i32 to vector<32x32xi32>
      %98 = arith.addi %95, %97 : vector<32x32xi32>
      %99 = arith.cmpi eq, %98, %96 : vector<32x32xi32>
      %100 = vector.shape_cast %88 : vector<1x32xf32> to vector<1x32xf32>
      %101 = vector.broadcast %100 : vector<1x32xf32> to vector<32x32xf32>
      %cst_60 = arith.constant 0.000000e+00 : f32
      %102 = vector.broadcast %cst_60 : f32 to vector<32x32xf32>
      %103 = arith.select %99, %101, %102 : vector<32x32xi1>, vector<32x32xf32>
      %cst_61 = arith.constant dense<0.000000e+00> : vector<32xf32>
      %104 = vector.multi_reduction <add>, %103, %cst_61 [1] : vector<32x32xf32> to vector<32xf32>
      %105 = vector.shape_cast %104 : vector<32xf32> to vector<32x1xf32>
      %106 = vector.broadcast %105 : vector<32x1xf32> to vector<32x32xf32>
      %107 = vector.broadcast %90 : vector<1x32xf32> to vector<32x32xf32>
      %108 = arith.mulf %106, %107 : vector<32x32xf32>
      %109 = arith.subf %94, %108 : vector<32x32xf32>
      %cst_62 = arith.constant 0.142857149 : f32
      %110 = vector.broadcast %cst_62 : f32 to vector<32x32xf32>
      %111 = arith.mulf %109, %110 : vector<32x32xf32>
      %112 = arith.mulf %111, %111 : vector<32x32xf32>
      %113 = vector.shape_cast %112 : vector<32x32xf32> to vector<1x32x32xf32>
      %cst_63 = arith.constant dense<0.000000e+00> : vector<1xf32>
      %114 = vector.multi_reduction <add>, %113, %cst_63 [1, 2] : vector<1x32x32xf32> to vector<1xf32>
      %115 = vector.shape_cast %114 : vector<1xf32> to vector<1x1x1xf32>
      %116 = vector.extract %115[0, 0, 0] : f32 from vector<1x1x1xf32>
      %117 = arith.addf %cst_54, %116 : f32
      %cst_64 = arith.constant 0.000000e+00 : f32
      %118 = vector.broadcast %cst_64 : f32 to vector<32x32xf32>
      %119 = arith.select %99, %111, %118 : vector<32x32xi1>, vector<32x32xf32>
      %cst_65 = arith.constant dense<0.000000e+00> : vector<32xf32>
      %120 = vector.multi_reduction <add>, %119, %cst_65 [1] : vector<32x32xf32> to vector<32xf32>
      %121 = vector.shape_cast %120 : vector<32xf32> to vector<32x1xf32>
      %122 = arith.mulf %121, %121 : vector<32x1xf32>
      %123 = vector.shape_cast %122 : vector<32x1xf32> to vector<1x32x1xf32>
      %cst_66 = arith.constant dense<0.000000e+00> : vector<1xf32>
      %124 = vector.multi_reduction <add>, %123, %cst_66 [1, 2] : vector<1x32x1xf32> to vector<1xf32>
      %125 = vector.shape_cast %124 : vector<1xf32> to vector<1x1x1xf32>
      %126 = vector.extract %125[0, 0, 0] : f32 from vector<1x1x1xf32>
      %127 = arith.addf %cst_55, %126 : f32
      %cst_67 = arith.constant 0.000000e+00 : f32
      %128 = vector.broadcast %cst_67 : f32 to vector<32x1xf32>
      %129 = arith.maximumf %121, %128 : vector<32x1xf32>
      %130 = math.sqrt %129 : vector<32x1xf32>
      %cst_68 = arith.constant 1.000000e+00 : f32
      %131 = vector.broadcast %cst_68 : f32 to vector<32x1xf32>
      %132 = arith.subf %131, %130 : vector<32x1xf32>
      %cst_69 = arith.constant 0.000000e+00 : f32
      %133 = vector.broadcast %cst_69 : f32 to vector<32x1xf32>
      %134 = arith.maximumf %132, %133 : vector<32x1xf32>
      %135 = vector.shape_cast %134 : vector<32x1xf32> to vector<1x32x1xf32>
      %cst_70 = arith.constant dense<0.000000e+00> : vector<1xf32>
      %136 = vector.multi_reduction <add>, %135, %cst_70 [1, 2] : vector<1x32x1xf32> to vector<1xf32>
      %137 = vector.shape_cast %136 : vector<1xf32> to vector<1x1x1xf32>
      %138 = vector.extract %137[0, 0, 0] : f32 from vector<1x1x1xf32>
      %139 = arith.addf %cst_56, %138 : f32
      %c1_i32_71 = arith.constant 1 : i32
      %cst_72 = arith.constant 3.125000e-02 : f32
      %140 = arith.mulf %139, %cst_72 : f32
      %141 = arith.subf %117, %127 : f32
      %cst_73 = arith.constant 3.125000e-02 : f32
      %142 = arith.mulf %141, %cst_73 : f32
      %143 = arith.addf %85, %140 : f32
      %cst_74 = arith.constant 5.000000e-01 : f32
      %144 = arith.mulf %cst_74, %143 : f32
      %145 = arith.addf %87, %142 : f32
      %cst_75 = arith.constant 5.000000e-01 : f32
      %146 = arith.mulf %cst_75, %145 : f32
      %c0_76 = arith.constant 0 : index
      %c0_77 = arith.constant 0 : index
      %147 = vector.load %arg8[%c0_76, %c0_77] : memref<1x32xf32, #tpu.memory_space<vmem>>, vector<1x32xf32>
      %148 = vector.shape_cast %147 : vector<1x32xf32> to vector<1x1x32xf32>
      %cst_78 = arith.constant dense<0.000000e+00> : vector<1xf32>
      %149 = vector.multi_reduction <add>, %148, %cst_78 [1, 2] : vector<1x1x32xf32> to vector<1xf32>
      %150 = vector.shape_cast %149 : vector<1xf32> to vector<1x1x1xf32>
      %151 = vector.extract %150[0, 0, 0] : f32 from vector<1x1x1xf32>
      %cst_79 = arith.constant 3.906250e-03 : f32
      %152 = arith.mulf %151, %cst_79 : f32
      %cst_80 = arith.constant 1.000000e+00 : f32
      %153 = arith.mulf %cst_80, %144 : f32
      %cst_81 = arith.constant 1.000000e+00 : f32
      %154 = arith.mulf %cst_81, %152 : f32
      %155 = arith.addf %153, %154 : f32
      %cst_82 = arith.constant 9.99999974E-6 : f32
      %156 = arith.mulf %cst_82, %146 : f32
      %157 = arith.addf %155, %156 : f32
      %c0_83 = arith.constant 0 : index
      %c0_84 = arith.constant 0 : index
      %158 = memref.load %arg3[%c0_83, %c0_84] : memref<1x1xf32, #tpu.memory_space<smem>>
      memref.store %157, %arg3[%c0_83, %c0_84] : memref<1x1xf32, #tpu.memory_space<smem>>
    } else {
    }
    return
  }
  func.func @transform_0(%arg0: i32) -> (i32, i32) {
    %c0_i32 = arith.constant 0 : i32
    %c0_i32_0 = arith.constant 0 : i32
    return %arg0, %c0_i32 : i32, i32
  }
  func.func @transform_1(%arg0: i32) -> (i32, i32) {
    %c0_i32 = arith.constant 0 : i32
    %c0_i32_0 = arith.constant 0 : i32
    return %arg0, %c0_i32 : i32, i32
  }
  func.func @transform_2(%arg0: i32) -> (i32, i32) {
    %c0_i32 = arith.constant 0 : i32
    %c0_i32_0 = arith.constant 0 : i32
    %c0_i32_1 = arith.constant 0 : i32
    return %c0_i32, %c0_i32_0 : i32, i32
  }
}

</mosaic_0001>

<llo_original>
// kernel: tpu_custom_call.1
$region0: #{tpu_custom_call.1}
  #allocation0 [shape = 'u32[]', space=smem, size = 0x4, offset = 0x4, fixed_abs, tag = 'smem constant byte address 0x4 - core index']
  #allocation1 [shape = 'u32[144,128]{1,0:T(1,128)}', space=vmem, size = 0x12000, scoped, tag = 'internal scratch']
  #allocation2 [shape = 'f32[32,32]{1,0:T(8,128)}', space=vmem, size = 0x4000, scoped, tag = 'scratch operand']
  #allocation3 [shape = 'f32[32,32]{1,0:T(8,128)}', space=vmem, size = 0x4000, scoped, tag = 'scratch operand']
  #allocation4 [shape = 'f32[1,32]{1,0:T(1,128)}', space=vmem, size = 0x200, scoped, tag = 'scratch operand']
  #allocation5 [shape = 'f32[1,32]{1,0:T(1,128)}', space=vmem, size = 0x200, scoped, tag = 'scratch operand']
  #allocation6 [shape = 'f32[1,32]{1,0:T(1,128)}', space=vmem, size = 0x200, scoped, tag = 'scratch operand']
  %s0 = inlined_call_operand.vmem [shape: f32[128,32], index: 0, kind: input, shape index: {}]
  %s1 = inlined_call_operand.vmem [shape: f32[128,32], index: 1, kind: input, shape index: {}]
  %s2 = inlined_call_operand.hbm [shape: f32[1,1], index: 2, kind: output, shape index: {}]
  %s3 = sld [smem:[#allocation0]]
  $region26: #{tpu_custom_call.1} parent=0
    _
  %s5 = ssub.s32 1, %s3
  %s6 = scalar_select 0, %s5, %s3
  $region1: #{tpu_custom_call.1} parent=0
    #allocation7 [shape = 'u8[512]{0}', space=smem, size = 0x200, scoped, tag = 'output window, operand 0, single buffered']
    #allocation8 [shape = 's32[1]{0}', space=sflag, size = 0x4, scoped, tag = 'scoped memory for tpu_custom_call.1']
    %7 = vsyncpa [#allocation8], 0
    // Predicated region
    $region2: #{tpu_custom_call.1} parent=1 // pred_check
      _
    $region3: #{tpu_custom_call.1} parent=1 // pred_check_branch
      %9 = sbr.rel (0) target = $region5
    $region4: #{tpu_custom_call.1} parent=1 // pred_region
      _
    $region5: #{tpu_custom_call.1} parent=1 // pred_fallthru
      _
    // Predicated region
    $region6: #{tpu_custom_call.1} parent=1 // pred_check
      _
    $region7: #{tpu_custom_call.1} parent=1 // pred_check_branch
      %11 = sbr.rel (0) target = $region9
    $region8: #{tpu_custom_call.1} parent=1 // pred_region
      _
    $region9: #{tpu_custom_call.1} parent=1 // pred_fallthru
      _
    %p12 = scmp.eq.s32.totalorder 0, 0
    // Predicated region
    $region10: #{tpu_custom_call.1} parent=1 // pred_check
      %p13 = pneg %p12
    $region11: #{tpu_custom_call.1} parent=1 // pred_check_branch
      %15 = sbr.rel (%p13) target = $region13
    $region12: #{tpu_custom_call.1} parent=1 // pred_region
      %vm16 = vcmask 261120
      %17 = vst.msk [vmem:[#allocation2] sm:$0xff] %vm16, 0.0
      %18 = vst.msk [vmem:[#allocation2 + $0x8] sm:$0xff] %vm16, 0.0
      %19 = vst.msk [vmem:[#allocation2 + $0x10] sm:$0xff] %vm16, 0.0
      %20 = vst.msk [vmem:[#allocation2 + $0x18] sm:$0xff] %vm16, 0.0
      %21 = vst.msk [vmem:[#allocation3] sm:$0xff] %vm16, 0.0
      %22 = vst.msk [vmem:[#allocation3 + $0x8] sm:$0xff] %vm16, 0.0
      %23 = vst.msk [vmem:[#allocation3 + $0x10] sm:$0xff] %vm16, 0.0
      %24 = vst.msk [vmem:[#allocation3 + $0x18] sm:$0xff] %vm16, 0.0
      %vm25 = vcmask 253952
      %26 = vst.msk [vmem:[#allocation4] sm:$0x1] %vm25, 0.0
      %27 = vst.msk [vmem:[#allocation5] sm:$0x1] %vm25, 0.0
      %28 = vst.msk [vmem:[#allocation6] sm:$0x1] %vm25, 0.0
    $region13: #{tpu_custom_call.1} parent=1 // pred_fallthru
      _
    %v29 = vld [vmem:[%s0] sm:$0xff]
    %v30 = vld [vmem:[%s0 + $0x8] sm:$0xff]
    %v31 = vld [vmem:[%s0 + $0x10] sm:$0xff]
    %v32 = vld [vmem:[%s0 + $0x18] sm:$0xff]
    %v33 = vld [vmem:[%s0 + $0x20] sm:$0xff]
    %v34 = vld [vmem:[%s0 + $0x28] sm:$0xff]
    %v35 = vld [vmem:[%s0 + $0x30] sm:$0xff]
    %v36 = vld [vmem:[%s0 + $0x38] sm:$0xff]
    %v37 = vld [vmem:[%s0 + $0x40] sm:$0xff]
    %v38 = vld [vmem:[%s0 + $0x48] sm:$0xff]
    %v39 = vld [vmem:[%s0 + $0x50] sm:$0xff]
    %v40 = vld [vmem:[%s0 + $0x58] sm:$0xff]
    %v41 = vld [vmem:[%s0 + $0x60] sm:$0xff]
    %v42 = vld [vmem:[%s0 + $0x68] sm:$0xff]
    %v43 = vld [vmem:[%s0 + $0x70] sm:$0xff]
    %v44 = vld [vmem:[%s0 + $0x78] sm:$0xff]
    %v45 = vld [vmem:[%s1] sm:$0xff]
    %v46 = vld [vmem:[%s1 + $0x8] sm:$0xff]
    %v47 = vld [vmem:[%s1 + $0x10] sm:$0xff]
    %v48 = vld [vmem:[%s1 + $0x18] sm:$0xff]
    %v49 = vld [vmem:[%s1 + $0x20] sm:$0xff]
    %v50 = vld [vmem:[%s1 + $0x28] sm:$0xff]
    %v51 = vld [vmem:[%s1 + $0x30] sm:$0xff]
    %v52 = vld [vmem:[%s1 + $0x38] sm:$0xff]
    %v53 = vld [vmem:[%s1 + $0x40] sm:$0xff]
    %v54 = vld [vmem:[%s1 + $0x48] sm:$0xff]
    %v55 = vld [vmem:[%s1 + $0x50] sm:$0xff]
    %v56 = vld [vmem:[%s1 + $0x58] sm:$0xff]
    %v57 = vld [vmem:[%s1 + $0x60] sm:$0xff]
    %v58 = vld [vmem:[%s1 + $0x68] sm:$0xff]
    %v59 = vld [vmem:[%s1 + $0x70] sm:$0xff]
    %v60 = vld [vmem:[%s1 + $0x78] sm:$0xff]
    %v61 = vld [vmem:[#allocation2] sm:$0xff]
    %v62 = vld [vmem:[#allocation2 + $0x8] sm:$0xff]
    %v63 = vld [vmem:[#allocation2 + $0x10] sm:$0xff]
    %v64 = vld [vmem:[#allocation2 + $0x18] sm:$0xff]
    %65 = vxpose.xlu0.b32.start [1/16] %v29, 128
    %66 = vxpose.xlu0.b32.cont [2/16] %v30, 128
    %67 = vxpose.xlu0.b32.cont [3/16] %v31, 128
    %68 = vxpose.xlu0.b32.cont [4/16] %v32, 128
    %69 = vxpose.xlu0.b32.cont [5/16] %v33, 128
    %70 = vxpose.xlu0.b32.cont [6/16] %v34, 128
    %71 = vxpose.xlu0.b32.cont [7/16] %v35, 128
    %72 = vxpose.xlu0.b32.cont [8/16] %v36, 128
    %73 = vxpose.xlu0.b32.cont [9/16] %v37, 128
    %74 = vxpose.xlu0.b32.cont [10/16] %v38, 128
    %75 = vxpose.xlu0.b32.cont [11/16] %v39, 128
    %76 = vxpose.xlu0.b32.cont [12/16] %v40, 128
    %77 = vxpose.xlu0.b32.cont [13/16] %v41, 128
    %78 = vxpose.xlu0.b32.cont [14/16] %v42, 128
    %79 = vxpose.xlu0.b32.cont [15/16] %v43, 128
    %80 = vxpose.xlu0.b32.end [16/16] %v44, 128
    %v81 = vpop.trf.xlu0
    %v82 = vpop.trf.xlu0
    %v83 = vpop.trf.xlu0
    %v84 = vpop.trf.xlu0
    %v85 = vpop.trf.xlu0
    %v86 = vpop.trf.xlu0
    %v87 = vpop.trf.xlu0
    %v88 = vpop.trf.xlu0
    %v89 = vpop.trf.xlu0
    %v90 = vpop.trf.xlu0
    %v91 = vpop.trf.xlu0
    %v92 = vpop.trf.xlu0
    %v93 = vpop.trf.xlu0
    %v94 = vpop.trf.xlu0
    %v95 = vpop.trf.xlu0
    %v96 = vpop.trf.xlu0
    %97 = vmatprep.subr.mxu0 0.0
    %98 = vmatpush1.msra.mxu0 %v44
    %99 = vmatprep.subr.mxu0 0.0
    %100 = vmatpush1.msra.mxu0 %v43
    %101 = vmatprep.subr.mxu0 0.0
    %102 = vmatpush1.msra.mxu0 %v42
    %103 = vmatprep.subr.mxu0 0.0
    %104 = vmatpush1.msra.mxu0 %v41
    %105 = vmatprep.subr.mxu0 0.0
    %106 = vmatpush1.msra.mxu0 %v40
    %107 = vmatprep.subr.mxu0 0.0
    %108 = vmatpush1.msra.mxu0 %v39
    %109 = vmatprep.subr.mxu0 0.0
    %110 = vmatpush1.msra.mxu0 %v38
    %111 = vmatprep.subr.mxu0 0.0
    %112 = vmatpush1.msra.mxu0 %v37
    %113 = vmatprep.subr.mxu0 0.0
    %114 = vmatpush1.msra.mxu0 %v36
    %115 = vmatprep.subr.mxu0 0.0
    %116 = vmatpush1.msra.mxu0 %v35
    %117 = vmatprep.subr.mxu0 0.0
    %118 = vmatpush1.msra.mxu0 %v34
    %119 = vmatprep.subr.mxu0 0.0
    %120 = vmatpush1.msra.mxu0 %v33
    %121 = vmatprep.subr.mxu0 0.0
    %122 = vmatpush1.msra.mxu0 %v32
    %123 = vmatprep.subr.mxu0 0.0
    %124 = vmatpush1.msra.mxu0 %v31
    %125 = vmatprep.subr.mxu0 0.0
    %126 = vmatpush1.msra.mxu0 %v30
    %127 = vmatprep.subr.mxu0 0.0
    %128 = vmatpush1.msra.mxu0 %v29
    %129 = vmatprep.subr.mxu0 0.0
    %130 = vmatpush2.msra.mxu0 0.0
    %131 = vmatprep.subr.mxu0 0.0
    %132 = vmatpush2.msra.mxu0 0.0
    %133 = vmatprep.subr.mxu0 0.0
    %134 = vmatpush2.msra.mxu0 0.0
    %135 = vmatprep.subr.mxu0 0.0
    %136 = vmatpush2.msra.mxu0 0.0
    %137 = vmatprep.subr.mxu0 0.0
    %138 = vmatpush2.msra.mxu0 0.0
    %139 = vmatprep.subr.mxu0 0.0
    %140 = vmatpush2.msra.mxu0 0.0
    %141 = vmatprep.subr.mxu0 0.0
    %142 = vmatpush2.msra.mxu0 0.0
    %143 = vmatprep.subr.mxu0 0.0
    %144 = vmatpush2.msra.mxu0 0.0
    %145 = vmatprep.subr.mxu0 0.0
    %146 = vmatpush2.msra.mxu0 0.0
    %147 = vmatprep.subr.mxu0 0.0
    %148 = vmatpush2.msra.mxu0 0.0
    %149 = vmatprep.subr.mxu0 0.0
    %150 = vmatpush2.msra.mxu0 0.0
    %151 = vmatprep.subr.mxu0 0.0
    %152 = vmatpush2.msra.mxu0 0.0
    %153 = vmatprep.subr.mxu0 0.0
    %154 = vmatpush2.msra.mxu0 0.0
    %155 = vmatprep.subr.mxu0 0.0
    %156 = vmatpush2.msra.mxu0 0.0
    %157 = vmatprep.subr.mxu0 0.0
    %158 = vmatpush2.msra.mxu0 0.0
    %159 = vmatprep.subr.mxu0 0.0
    %160 = vmatpush2.msra.mxu0 0.0
    %161 = vmatprep.mubr.f32.mxu0 0.0
    %162 = vmatmul.mubr.f32.gmra.mxu0 %v81
    %v163 = vpop.f32.mrf.mxu0
    %v164 = vadd.f32 0.0, %v163
    %v165 = vpop.f32.mrf.mxu0
    %166 = vmatprep.mubr.f32.mxu0 0.0
    %167 = vmatmul.mubr.f32.gmra.mxu0 %v82
    %v168 = vpop.f32.mrf.mxu0
    %v169 = vadd.f32 0.0, %v168
    %v170 = vpop.f32.mrf.mxu0
    %171 = vmatprep.mubr.f32.mxu0 0.0
    %172 = vmatmul.mubr.f32.gmra.mxu0 %v83
    %v173 = vpop.f32.mrf.mxu0
    %v174 = vadd.f32 0.0, %v173
    %v175 = vpop.f32.mrf.mxu0
    %176 = vmatprep.mubr.f32.mxu0 0.0
    %177 = vmatmul.mubr.f32.gmra.mxu0 %v84
    %v178 = vpop.f32.mrf.mxu0
    %v179 = vadd.f32 0.0, %v178
    %v180 = vpop.f32.mrf.mxu0
    %181 = vdwg.mxu0
    %v182 = vadd.f32 %v61, %v164
    %v183 = vadd.f32 %v62, %v169
    %v184 = vadd.f32 %v63, %v174
    %v185 = vadd.f32 %v64, %v179
    %vm186 = vcmask 261120
    %187 = vst.msk [vmem:[#allocation2] sm:$0xff] %vm186, %v182
    %188 = vst.msk [vmem:[#allocation2 + $0x8] sm:$0xff] %vm186, %v183
    %189 = vst.msk [vmem:[#allocation2 + $0x10] sm:$0xff] %vm186, %v184
    %190 = vst.msk [vmem:[#allocation2 + $0x18] sm:$0xff] %vm186, %v185
    %v191 = vld [vmem:[#allocation3] sm:$0xff]
    %v192 = vld [vmem:[#allocation3 + $0x8] sm:$0xff]
    %v193 = vld [vmem:[#allocation3 + $0x10] sm:$0xff]
    %v194 = vld [vmem:[#allocation3 + $0x18] sm:$0xff]
    %195 = vxpose.xlu0.b32.start [1/16] %v45, 128
    %196 = vxpose.xlu0.b32.cont [2/16] %v46, 128
    %197 = vxpose.xlu0.b32.cont [3/16] %v47, 128
    %198 = vxpose.xlu0.b32.cont [4/16] %v48, 128
    %199 = vxpose.xlu0.b32.cont [5/16] %v49, 128
    %200 = vxpose.xlu0.b32.cont [6/16] %v50, 128
    %201 = vxpose.xlu0.b32.cont [7/16] %v51, 128
    %202 = vxpose.xlu0.b32.cont [8/16] %v52, 128
    %203 = vxpose.xlu0.b32.cont [9/16] %v53, 128
    %204 = vxpose.xlu0.b32.cont [10/16] %v54, 128
    %205 = vxpose.xlu0.b32.cont [11/16] %v55, 128
    %206 = vxpose.xlu0.b32.cont [12/16] %v56, 128
    %207 = vxpose.xlu0.b32.cont [13/16] %v57, 128
    %208 = vxpose.xlu0.b32.cont [14/16] %v58, 128
    %209 = vxpose.xlu0.b32.cont [15/16] %v59, 128
    %210 = vxpose.xlu0.b32.end [16/16] %v60, 128
    %v211 = vpop.trf.xlu0
    %v212 = vpop.trf.xlu0
    %v213 = vpop.trf.xlu0
    %v214 = vpop.trf.xlu0
    %v215 = vpop.trf.xlu0
    %v216 = vpop.trf.xlu0
    %v217 = vpop.trf.xlu0
    %v218 = vpop.trf.xlu0
    %v219 = vpop.trf.xlu0
    %v220 = vpop.trf.xlu0
    %v221 = vpop.trf.xlu0
    %v222 = vpop.trf.xlu0
    %v223 = vpop.trf.xlu0
    %v224 = vpop.trf.xlu0
    %v225 = vpop.trf.xlu0
    %v226 = vpop.trf.xlu0
    %227 = vmatprep.subr.mxu0 0.0
    %228 = vmatpush1.msra.mxu0 %v60
    %229 = vmatprep.subr.mxu0 0.0
    %230 = vmatpush1.msra.mxu0 %v59
    %231 = vmatprep.subr.mxu0 0.0
    %232 = vmatpush1.msra.mxu0 %v58
    %233 = vmatprep.subr.mxu0 0.0
    %234 = vmatpush1.msra.mxu0 %v57
    %235 = vmatprep.subr.mxu0 0.0
    %236 = vmatpush1.msra.mxu0 %v56
    %237 = vmatprep.subr.mxu0 0.0
    %238 = vmatpush1.msra.mxu0 %v55
    %239 = vmatprep.subr.mxu0 0.0
    %240 = vmatpush1.msra.mxu0 %v54
    %241 = vmatprep.subr.mxu0 0.0
    %242 = vmatpush1.msra.mxu0 %v53
    %243 = vmatprep.subr.mxu0 0.0
    %244 = vmatpush1.msra.mxu0 %v52
    %245 = vmatprep.subr.mxu0 0.0
    %246 = vmatpush1.msra.mxu0 %v51
    %247 = vmatprep.subr.mxu0 0.0
    %248 = vmatpush1.msra.mxu0 %v50
    %249 = vmatprep.subr.mxu0 0.0
    %250 = vmatpush1.msra.mxu0 %v49
    %251 = vmatprep.subr.mxu0 0.0
    %252 = vmatpush1.msra.mxu0 %v48
    %253 = vmatprep.subr.mxu0 0.0
    %254 = vmatpush1.msra.mxu0 %v47
    %255 = vmatprep.subr.mxu0 0.0
    %256 = vmatpush1.msra.mxu0 %v46
    %257 = vmatprep.subr.mxu0 0.0
    %258 = vmatpush1.msra.mxu0 %v45
    %259 = vmatprep.subr.mxu0 0.0
    %260 = vmatpush2.msra.mxu0 0.0
    %261 = vmatprep.subr.mxu0 0.0
    %262 = vmatpush2.msra.mxu0 0.0
    %263 = vmatprep.subr.mxu0 0.0
    %264 = vmatpush2.msra.mxu0 0.0
    %265 = vmatprep.subr.mxu0 0.0
    %266 = vmatpush2.msra.mxu0 0.0
    %267 = vmatprep.subr.mxu0 0.0
    %268 = vmatpush2.msra.mxu0 0.0
    %269 = vmatprep.subr.mxu0 0.0
    %270 = vmatpush2.msra.mxu0 0.0
    %271 = vmatprep.subr.mxu0 0.0
    %272 = vmatpush2.msra.mxu0 0.0
    %273 = vmatprep.subr.mxu0 0.0
    %274 = vmatpush2.msra.mxu0 0.0
    %275 = vmatprep.subr.mxu0 0.0
    %276 = vmatpush2.msra.mxu0 0.0
    %277 = vmatprep.subr.mxu0 0.0
    %278 = vmatpush2.msra.mxu0 0.0
    %279 = vmatprep.subr.mxu0 0.0
    %280 = vmatpush2.msra.mxu0 0.0
    %281 = vmatprep.subr.mxu0 0.0
    %282 = vmatpush2.msra.mxu0 0.0
    %283 = vmatprep.subr.mxu0 0.0
    %284 = vmatpush2.msra.mxu0 0.0
    %285 = vmatprep.subr.mxu0 0.0
    %286 = vmatpush2.msra.mxu0 0.0
    %287 = vmatprep.subr.mxu0 0.0
    %288 = vmatpush2.msra.mxu0 0.0
    %289 = vmatprep.subr.mxu0 0.0
    %290 = vmatpush2.msra.mxu0 0.0
    %291 = vmatprep.mubr.f32.mxu0 0.0
    %292 = vmatmul.mubr.f32.gmra.mxu0 %v211
    %v293 = vpop.f32.mrf.mxu0
    %v294 = vadd.f32 0.0, %v293
    %v295 = vpop.f32.mrf.mxu0
    %296 = vmatprep.mubr.f32.mxu0 0.0
    %297 = vmatmul.mubr.f32.gmra.mxu0 %v212
    %v298 = vpop.f32.mrf.mxu0
    %v299 = vadd.f32 0.0, %v298
    %v300 = vpop.f32.mrf.mxu0
    %301 = vmatprep.mubr.f32.mxu0 0.0
    %302 = vmatmul.mubr.f32.gmra.mxu0 %v213
    %v303 = vpop.f32.mrf.mxu0
    %v304 = vadd.f32 0.0, %v303
    %v305 = vpop.f32.mrf.mxu0
    %306 = vmatprep.mubr.f32.mxu0 0.0
    %307 = vmatmul.mubr.f32.gmra.mxu0 %v214
    %v308 = vpop.f32.mrf.mxu0
    %v309 = vadd.f32 0.0, %v308
    %v310 = vpop.f32.mrf.mxu0
    %311 = vdwg.mxu0
    %v312 = vadd.f32 %v191, %v294
    %v313 = vadd.f32 %v192, %v299
    %v314 = vadd.f32 %v193, %v304
    %v315 = vadd.f32 %v194, %v309
    %316 = vst.msk [vmem:[#allocation3] sm:$0xff] %vm186, %v312
    %317 = vst.msk [vmem:[#allocation3 + $0x8] sm:$0xff] %vm186, %v313
    %318 = vst.msk [vmem:[#allocation3 + $0x10] sm:$0xff] %vm186, %v314
    %319 = vst.msk [vmem:[#allocation3 + $0x18] sm:$0xff] %vm186, %v315
    %v320 = vld [vmem:[#allocation4] sm:$0x1]
    %v321 = vsel %vm186, %v29, 0.0
    %v322 = vsel %vm186, %v30, 0.0
    %v323 = vadd.f32 %v321, %v322
    %v324 = vsel %vm186, %v31, 0.0
    %v325 = vadd.f32 %v323, %v324
    %v326 = vsel %vm186, %v32, 0.0
    %v327 = vadd.f32 %v325, %v326
    %v328 = vsel %vm186, %v33, 0.0
    %v329 = vadd.f32 %v327, %v328
    %v330 = vsel %vm186, %v34, 0.0
    %v331 = vadd.f32 %v329, %v330
    %v332 = vsel %vm186, %v35, 0.0
    %v333 = vadd.f32 %v331, %v332
    %v334 = vsel %vm186, %v36, 0.0
    %v335 = vadd.f32 %v333, %v334
    %v336 = vsel %vm186, %v37, 0.0
    %v337 = vadd.f32 %v335, %v336
    %v338 = vsel %vm186, %v38, 0.0
    %v339 = vadd.f32 %v337, %v338
    %v340 = vsel %vm186, %v39, 0.0
    %v341 = vadd.f32 %v339, %v340
    %v342 = vsel %vm186, %v40, 0.0
    %v343 = vadd.f32 %v341, %v342
    %v344 = vsel %vm186, %v41, 0.0
    %v345 = vadd.f32 %v343, %v344
    %v346 = vsel %vm186, %v42, 0.0
    %v347 = vadd.f32 %v345, %v346
    %v348 = vsel %vm186, %v43, 0.0
    %v349 = vadd.f32 %v347, %v348
    %v350 = vsel %vm186, %v44, 0.0
    %v351 = vadd.f32 %v349, %v350
    %v352 = vrot.slane %v351, 4
    %v353 = vadd.f32 %v351, %v352
    %v354 = vrot.slane %v353, 2
    %v355 = vadd.f32 %v353, %v354
    %v356 = vrot.slane %v355, 1
    %v357 = vadd.f32 %v355, %v356
    %v358 = vadd.f32 %v320, %v357
    %vm359 = vcmask 253952
    %360 = vst.msk [vmem:[#allocation4] sm:$0x1] %vm359, %v358
    %v361 = vld [vmem:[#allocation5] sm:$0x1]
    %v362 = vsel %vm186, %v45, 0.0
    %v363 = vsel %vm186, %v46, 0.0
    %v364 = vadd.f32 %v362, %v363
    %v365 = vsel %vm186, %v47, 0.0
    %v366 = vadd.f32 %v364, %v365
    %v367 = vsel %vm186, %v48, 0.0
    %v368 = vadd.f32 %v366, %v367
    %v369 = vsel %vm186, %v49, 0.0
    %v370 = vadd.f32 %v368, %v369
    %v371 = vsel %vm186, %v50, 0.0
    %v372 = vadd.f32 %v370, %v371
    %v373 = vsel %vm186, %v51, 0.0
    %v374 = vadd.f32 %v372, %v373
    %v375 = vsel %vm186, %v52, 0.0
    %v376 = vadd.f32 %v374, %v375
    %v377 = vsel %vm186, %v53, 0.0
    %v378 = vadd.f32 %v376, %v377
    %v379 = vsel %vm186, %v54, 0.0
    %v380 = vadd.f32 %v378, %v379
    %v381 = vsel %vm186, %v55, 0.0
    %v382 = vadd.f32 %v380, %v381
    %v383 = vsel %vm186, %v56, 0.0
    %v384 = vadd.f32 %v382, %v383
    %v385 = vsel %vm186, %v57, 0.0
    %v386 = vadd.f32 %v384, %v385
    %v387 = vsel %vm186, %v58, 0.0
    %v388 = vadd.f32 %v386, %v387
    %v389 = vsel %vm186, %v59, 0.0
    %v390 = vadd.f32 %v388, %v389
    %v391 = vsel %vm186, %v60, 0.0
    %v392 = vadd.f32 %v390, %v391
    %v393 = vrot.slane %v392, 4
    %v394 = vadd.f32 %v392, %v393
    %v395 = vrot.slane %v394, 2
    %v396 = vadd.f32 %v394, %v395
    %v397 = vrot.slane %v396, 1
    %v398 = vadd.f32 %v396, %v397
    %v399 = vadd.f32 %v361, %v398
    %400 = vst.msk [vmem:[#allocation5] sm:$0x1] %vm359, %v399
    %v401 = vsub.f32 %v29, %v45
    %v402 = vsub.f32 %v30, %v46
    %v403 = vsub.f32 %v31, %v47
    %v404 = vsub.f32 %v32, %v48
    %v405 = vsub.f32 %v33, %v49
    %v406 = vsub.f32 %v34, %v50
    %v407 = vsub.f32 %v35, %v51
    %v408 = vsub.f32 %v36, %v52
    %v409 = vsub.f32 %v37, %v53
    %v410 = vsub.f32 %v38, %v54
    %v411 = vsub.f32 %v39, %v55
    %v412 = vsub.f32 %v40, %v56
    %v413 = vsub.f32 %v41, %v57
    %v414 = vsub.f32 %v42, %v58
    %v415 = vsub.f32 %v43, %v59
    %v416 = vsub.f32 %v44, %v60
    %v417 = vld [vmem:[#allocation6] sm:$0x1]
    %v418 = vmul.f32 %v401, %v401
    %v419 = vmul.f32 %v402, %v402
    %v420 = vmul.f32 %v403, %v403
    %v421 = vmul.f32 %v404, %v404
    %v422 = vmul.f32 %v405, %v405
    %v423 = vmul.f32 %v406, %v406
    %v424 = vmul.f32 %v407, %v407
    %v425 = vmul.f32 %v408, %v408
    %v426 = vmul.f32 %v409, %v409
    %v427 = vmul.f32 %v410, %v410
    %v428 = vmul.f32 %v411, %v411
    %v429 = vmul.f32 %v412, %v412
    %v430 = vmul.f32 %v413, %v413
    %v431 = vmul.f32 %v414, %v414
    %v432 = vmul.f32 %v415, %v415
    %v433 = vmul.f32 %v416, %v416
    %v434 = vsel %vm186, %v418, 0.0
    %v435 = vsel %vm186, %v419, 0.0
    %v436 = vadd.f32 %v434, %v435
    %v437 = vsel %vm186, %v420, 0.0
    %v438 = vadd.f32 %v436, %v437
    %v439 = vsel %vm186, %v421, 0.0
    %v440 = vadd.f32 %v438, %v439
    %v441 = vsel %vm186, %v422, 0.0
    %v442 = vadd.f32 %v440, %v441
    %v443 = vsel %vm186, %v423, 0.0
    %v444 = vadd.f32 %v442, %v443
    %v445 = vsel %vm186, %v424, 0.0
    %v446 = vadd.f32 %v444, %v445
    %v447 = vsel %vm186, %v425, 0.0
    %v448 = vadd.f32 %v446, %v447
    %v449 = vsel %vm186, %v426, 0.0
    %v450 = vadd.f32 %v448, %v449
    %v451 = vsel %vm186, %v427, 0.0
    %v452 = vadd.f32 %v450, %v451
    %v453 = vsel %vm186, %v428, 0.0
    %v454 = vadd.f32 %v452, %v453
    %v455 = vsel %vm186, %v429, 0.0
    %v456 = vadd.f32 %v454, %v455
    %v457 = vsel %vm186, %v430, 0.0
    %v458 = vadd.f32 %v456, %v457
    %v459 = vsel %vm186, %v431, 0.0
    %v460 = vadd.f32 %v458, %v459
    %v461 = vsel %vm186, %v432, 0.0
    %v462 = vadd.f32 %v460, %v461
    %v463 = vsel %vm186, %v433, 0.0
    %v464 = vadd.f32 %v462, %v463
    %v465 = vrot.slane %v464, 4
    %v466 = vadd.f32 %v464, %v465
    %v467 = vrot.slane %v466, 2
    %v468 = vadd.f32 %v466, %v467
    %v469 = vrot.slane %v468, 1
    %v470 = vadd.f32 %v468, %v469
    %v471 = vadd.f32 %v417, %v470
    %472 = vst.msk [vmem:[#allocation6] sm:$0x1] %vm359, %v471
    // Predicated region
    $region14: #{tpu_custom_call.1} parent=1 // pred_check
      %p473 = pneg %p12
    $region15: #{tpu_custom_call.1} parent=1 // pred_check_branch
      %475 = sbr.rel (%p473) target = $region17
    $region16: #{tpu_custom_call.1} parent=1 // pred_region
      %v476 = vld [vmem:[#allocation4] sm:$0x1]
      %v477 = vmul.f32 %v476, 0.125
      %v478 = vld [vmem:[#allocation2] sm:$0xff]
      %v479 = vld [vmem:[#allocation2 + $0x8] sm:$0xff]
      %v480 = vld [vmem:[#allocation2 + $0x10] sm:$0xff]
      %v481 = vld [vmem:[#allocation2 + $0x18] sm:$0xff]
      %v482 = vlaneseq
      %v483 = vshrl.u32 %v482, 7
      %v484 = vadd.s32 %v483, 8
      %v485 = vadd.s32 %v483, 16
      %v486 = vadd.s32 %v483, 24
      %v487 = vlaneseq
      %v488 = vand.u32 %v487, 127
      %v489 = vstv 0
      %v490 = vadd.s32 %v483, %v489
      %v491 = vadd.s32 %v484, %v489
      %v492 = vadd.s32 %v485, %v489
      %v493 = vadd.s32 %v486, %v489
      %vm494 = vcmp.eq.s32.totalorder %v490, %v488
      %vm495 = vcmp.eq.s32.totalorder %v491, %v488
      %vm496 = vcmp.eq.s32.totalorder %v492, %v488
      %vm497 = vcmp.eq.s32.totalorder %v493, %v488
      %v499 = vlaneseq
      %v500 = vshrl.u32 %v499, 7
      %v501 = vsub.s32 0, %v500
      %v502 = vrot.slane %v476, %v501
      %v504 = vsel %vm494, %v502, 0.0
      %v505 = vsel %vm495, %v502, 0.0
      %v506 = vsel %vm496, %v502, 0.0
      %v507 = vsel %vm497, %v502, 0.0
      %v508 = vsel %vm186, %v504, 0.0
      %509 = vadd.xlane.f32.xlu0 %v508
      %v510 = vpop.xlane.xlu0 %509
      %v511 = vsel %vm186, %v505, 0.0
      %512 = vadd.xlane.f32.xlu0 %v511
      %v513 = vpop.xlane.xlu0 %512
      %v514 = vsel %vm186, %v506, 0.0
      %515 = vadd.xlane.f32.xlu0 %v514
      %v516 = vpop.xlane.xlu0 %515
      %v517 = vsel %vm186, %v507, 0.0
      %518 = vadd.xlane.f32.xlu0 %v517
      %v519 = vpop.xlane.xlu0 %518
      %v521 = vlaneseq
      %v522 = vshrl.u32 %v521, 7
      %v523 = vsub.s32 0, %v522
      %v524 = vrot.slane %v477, %v523
      %v526 = vmul.f32 %v510, %v524
      %v527 = vmul.f32 %v513, %v524
      %v528 = vmul.f32 %v516, %v524
      %v529 = vmul.f32 %v519, %v524
      %v530 = vsub.f32 %v478, %v526
      %v531 = vsub.f32 %v479, %v527
      %v532 = vsub.f32 %v480, %v528
      %v533 = vsub.f32 %v481, %v529
      %v534 = vmul.f32 %v530, 0.14285715
      %v535 = vmul.f32 %v531, 0.14285715
      %v536 = vmul.f32 %v532, 0.14285715
      %v537 = vmul.f32 %v533, 0.14285715
      %v538 = vmul.f32 %v534, %v534
      %v539 = vmul.f32 %v535, %v535
      %v540 = vmul.f32 %v536, %v536
      %v541 = vmul.f32 %v537, %v537
      %v542 = vsel %vm186, %v538, 0.0
      %v543 = vsel %vm186, %v539, 0.0
      %v544 = vadd.f32 %v542, %v543
      %v545 = vsel %vm186, %v540, 0.0
      %v546 = vadd.f32 %v544, %v545
      %v547 = vsel %vm186, %v541, 0.0
      %v548 = vadd.f32 %v546, %v547
      %549 = vadd.xlane.f32.xlu0 %v548
      %v550 = vpop.xlane.xlu0 %549
      %v551 = vrot.slane %v550, 4
      %v552 = vadd.f32 %v550, %v551
      %v553 = vrot.slane %v552, 2
      %v554 = vadd.f32 %v552, %v553
      %v555 = vrot.slane %v554, 1
      %v556 = vadd.f32 %v554, %v555
      %s557 = vtos %v556
      %s558 = sadd.f32 %s557, 0.0
      %v559 = vsel %vm494, %v534, 0.0
      %v560 = vsel %vm495, %v535, 0.0
      %v561 = vsel %vm496, %v536, 0.0
      %v562 = vsel %vm497, %v537, 0.0
      %v563 = vsel %vm186, %v559, 0.0
      %564 = vadd.xlane.f32.xlu0 %v563
      %v565 = vpop.xlane.xlu0 %564
      %v566 = vsel %vm186, %v560, 0.0
      %567 = vadd.xlane.f32.xlu0 %v566
      %v568 = vpop.xlane.xlu0 %567
      %v569 = vsel %vm186, %v561, 0.0
      %570 = vadd.xlane.f32.xlu0 %v569
      %v571 = vpop.xlane.xlu0 %570
      %v572 = vsel %vm186, %v562, 0.0
      %573 = vadd.xlane.f32.xlu0 %v572
      %v574 = vpop.xlane.xlu0 %573
      %v575 = vmul.f32 %v565, %v565
      %v576 = vmul.f32 %v568, %v568
      %v577 = vmul.f32 %v571, %v571
      %v578 = vmul.f32 %v574, %v574
      %vm579 = vcmask 7168
      %v580 = vsel %vm579, %v575, 0.0
      %v581 = vsel %vm579, %v576, 0.0
      %v582 = vadd.f32 %v580, %v581
      %v583 = vsel %vm579, %v577, 0.0
      %v584 = vadd.f32 %v582, %v583
      %v585 = vsel %vm579, %v578, 0.0
      %v586 = vadd.f32 %v584, %v585
      %587 = vadd.xlane.f32.xlu0 %v586
      %v588 = vpop.xlane.xlu0 %587
      %v589 = vrot.slane %v588, 4
      %v590 = vadd.f32 %v588, %v589
      %v591 = vrot.slane %v590, 2
      %v592 = vadd.f32 %v590, %v591
      %v593 = vrot.slane %v592, 1
      %v594 = vadd.f32 %v592, %v593
      %s595 = vtos %v594
      %s596 = sadd.f32 %s595, 0.0
      %v597 = vmax.f32 %v565, 0.0
      %v598 = vmax.f32 %v568, 0.0
      %v599 = vmax.f32 %v571, 0.0
      %v600 = vmax.f32 %v574, 0.0
      %v601 = vrsqrt.pop %v597
      %v602 = vmul.f32 %v597, %v601
      %vm603 = vcmp.eq.f32.partialorder %v597, inf
      %v604 = vsel %vm603, %v597, %v602
      %vm605 = vcmp.eq.f32.partialorder %v597, 0.0
      %v606 = vand.u32 %v597, 2147483648
      %v607 = vsel %vm605, %v606, %v604
      %v608 = vrsqrt.pop %v598
      %v609 = vmul.f32 %v598, %v608
      %vm610 = vcmp.eq.f32.partialorder %v598, inf
      %v611 = vsel %vm610, %v598, %v609
      %vm612 = vcmp.eq.f32.partialorder %v598, 0.0
      %v613 = vand.u32 %v598, 2147483648
      %v614 = vsel %vm612, %v613, %v611
      %v615 = vrsqrt.pop %v599
      %v616 = vmul.f32 %v599, %v615
      %vm617 = vcmp.eq.f32.partialorder %v599, inf
      %v618 = vsel %vm617, %v599, %v616
      %vm619 = vcmp.eq.f32.partialorder %v599, 0.0
      %v620 = vand.u32 %v599, 2147483648
      %v621 = vsel %vm619, %v620, %v618
      %v622 = vrsqrt.pop %v600
      %v623 = vmul.f32 %v600, %v622
      %vm624 = vcmp.eq.f32.partialorder %v600, inf
      %v625 = vsel %vm624, %v600, %v623
      %vm626 = vcmp.eq.f32.partialorder %v600, 0.0
      %v627 = vand.u32 %v600, 2147483648
      %v628 = vsel %vm626, %v627, %v625
      %v629 = vsub.f32 1.0, %v607
      %v630 = vsub.f32 1.0, %v614
      %v631 = vsub.f32 1.0, %v621
      %v632 = vsub.f32 1.0, %v628
      %v633 = vmax.f32 %v629, 0.0
      %v634 = vmax.f32 %v630, 0.0
      %v635 = vmax.f32 %v631, 0.0
      %v636 = vmax.f32 %v632, 0.0
      %v637 = vsel %vm579, %v633, 0.0
      %v638 = vsel %vm579, %v634, 0.0
      %v639 = vadd.f32 %v637, %v638
      %v640 = vsel %vm579, %v635, 0.0
      %v641 = vadd.f32 %v639, %v640
      %v642 = vsel %vm579, %v636, 0.0
      %v643 = vadd.f32 %v641, %v642
      %644 = vadd.xlane.f32.xlu0 %v643
      %v645 = vpop.xlane.xlu0 %644
      %v646 = vrot.slane %v645, 4
      %v647 = vadd.f32 %v645, %v646
      %v648 = vrot.slane %v647, 2
      %v649 = vadd.f32 %v647, %v648
      %v650 = vrot.slane %v649, 1
      %v651 = vadd.f32 %v649, %v650
      %s652 = vtos %v651
      %s653 = sadd.f32 %s652, 0.0
      %s654 = smul.f32 %s653, 0.03125
      %s655 = ssub.f32 %s558, %s596
      %s656 = smul.f32 %s655, 0.03125
      %v657 = vld [vmem:[#allocation5] sm:$0x1]
      %v658 = vmul.f32 %v657, 0.125
      %v659 = vld [vmem:[#allocation3] sm:$0xff]
      %v660 = vld [vmem:[#allocation3 + $0x8] sm:$0xff]
      %v661 = vld [vmem:[#allocation3 + $0x10] sm:$0xff]
      %v662 = vld [vmem:[#allocation3 + $0x18] sm:$0xff]
      %v664 = vlaneseq
      %v665 = vshrl.u32 %v664, 7
      %v666 = vsub.s32 0, %v665
      %v667 = vrot.slane %v657, %v666
      %v669 = vsel %vm494, %v667, 0.0
      %v670 = vsel %vm495, %v667, 0.0
      %v671 = vsel %vm496, %v667, 0.0
      %v672 = vsel %vm497, %v667, 0.0
      %v673 = vsel %vm186, %v669, 0.0
      %674 = vadd.xlane.f32.xlu0 %v673
      %v675 = vpop.xlane.xlu0 %674
      %v676 = vsel %vm186, %v670, 0.0
      %677 = vadd.xlane.f32.xlu0 %v676
      %v678 = vpop.xlane.xlu0 %677
      %v679 = vsel %vm186, %v671, 0.0
      %680 = vadd.xlane.f32.xlu0 %v679
      %v681 = vpop.xlane.xlu0 %680
      %v682 = vsel %vm186, %v672, 0.0
      %683 = vadd.xlane.f32.xlu0 %v682
      %v684 = vpop.xlane.xlu0 %683
      %v686 = vlaneseq
      %v687 = vshrl.u32 %v686, 7
      %v688 = vsub.s32 0, %v687
      %v689 = vrot.slane %v658, %v688
      %v691 = vmul.f32 %v675, %v689
      %v692 = vmul.f32 %v678, %v689
      %v693 = vmul.f32 %v681, %v689
      %v694 = vmul.f32 %v684, %v689
      %v695 = vsub.f32 %v659, %v691
      %v696 = vsub.f32 %v660, %v692
      %v697 = vsub.f32 %v661, %v693
      %v698 = vsub.f32 %v662, %v694
      %v699 = vmul.f32 %v695, 0.14285715
      %v700 = vmul.f32 %v696, 0.14285715
      %v701 = vmul.f32 %v697, 0.14285715
      %v702 = vmul.f32 %v698, 0.14285715
      %v703 = vmul.f32 %v699, %v699
      %v704 = vmul.f32 %v700, %v700
      %v705 = vmul.f32 %v701, %v701
      %v706 = vmul.f32 %v702, %v702
      %v707 = vsel %vm186, %v703, 0.0
      %v708 = vsel %vm186, %v704, 0.0
      %v709 = vadd.f32 %v707, %v708
      %v710 = vsel %vm186, %v705, 0.0
      %v711 = vadd.f32 %v709, %v710
      %v712 = vsel %vm186, %v706, 0.0
      %v713 = vadd.f32 %v711, %v712
      %714 = vadd.xlane.f32.xlu0 %v713
      %v715 = vpop.xlane.xlu0 %714
      %v716 = vrot.slane %v715, 4
      %v717 = vadd.f32 %v715, %v716
      %v718 = vrot.slane %v717, 2
      %v719 = vadd.f32 %v717, %v718
      %v720 = vrot.slane %v719, 1
      %v721 = vadd.f32 %v719, %v720
      %s722 = vtos %v721
      %s723 = sadd.f32 %s722, 0.0
      %v724 = vsel %vm494, %v699, 0.0
      %v725 = vsel %vm495, %v700, 0.0
      %v726 = vsel %vm496, %v701, 0.0
      %v727 = vsel %vm497, %v702, 0.0
      %v728 = vsel %vm186, %v724, 0.0
      %729 = vadd.xlane.f32.xlu0 %v728
      %v730 = vpop.xlane.xlu0 %729
      %v731 = vsel %vm186, %v725, 0.0
      %732 = vadd.xlane.f32.xlu0 %v731
      %v733 = vpop.xlane.xlu0 %732
      %v734 = vsel %vm186, %v726, 0.0
      %735 = vadd.xlane.f32.xlu0 %v734
      %v736 = vpop.xlane.xlu0 %735
      %v737 = vsel %vm186, %v727, 0.0
      %738 = vadd.xlane.f32.xlu0 %v737
      %v739 = vpop.xlane.xlu0 %738
      %v740 = vmul.f32 %v730, %v730
      %v741 = vmul.f32 %v733, %v733
      %v742 = vmul.f32 %v736, %v736
      %v743 = vmul.f32 %v739, %v739
      %v744 = vsel %vm579, %v740, 0.0
      %v745 = vsel %vm579, %v741, 0.0
      %v746 = vadd.f32 %v744, %v745
      %v747 = vsel %vm579, %v742, 0.0
      %v748 = vadd.f32 %v746, %v747
      %v749 = vsel %vm579, %v743, 0.0
      %v750 = vadd.f32 %v748, %v749
      %751 = vadd.xlane.f32.xlu0 %v750
      %v752 = vpop.xlane.xlu0 %751
      %v753 = vrot.slane %v752, 4
      %v754 = vadd.f32 %v752, %v753
      %v755 = vrot.slane %v754, 2
      %v756 = vadd.f32 %v754, %v755
      %v757 = vrot.slane %v756, 1
      %v758 = vadd.f32 %v756, %v757
      %s759 = vtos %v758
      %s760 = sadd.f32 %s759, 0.0
      %v761 = vmax.f32 %v730, 0.0
      %v762 = vmax.f32 %v733, 0.0
      %v763 = vmax.f32 %v736, 0.0
      %v764 = vmax.f32 %v739, 0.0
      %v765 = vrsqrt.pop %v761
      %v766 = vmul.f32 %v761, %v765
      %vm767 = vcmp.eq.f32.partialorder %v761, inf
      %v768 = vsel %vm767, %v761, %v766
      %vm769 = vcmp.eq.f32.partialorder %v761, 0.0
      %v770 = vand.u32 %v761, 2147483648
      %v771 = vsel %vm769, %v770, %v768
      %v772 = vrsqrt.pop %v762
      %v773 = vmul.f32 %v762, %v772
      %vm774 = vcmp.eq.f32.partialorder %v762, inf
      %v775 = vsel %vm774, %v762, %v773
      %vm776 = vcmp.eq.f32.partialorder %v762, 0.0
      %v777 = vand.u32 %v762, 2147483648
      %v778 = vsel %vm776, %v777, %v775
      %v779 = vrsqrt.pop %v763
      %v780 = vmul.f32 %v763, %v779
      %vm781 = vcmp.eq.f32.partialorder %v763, inf
      %v782 = vsel %vm781, %v763, %v780
      %vm783 = vcmp.eq.f32.partialorder %v763, 0.0
      %v784 = vand.u32 %v763, 2147483648
      %v785 = vsel %vm783, %v784, %v782
      %v786 = vrsqrt.pop %v764
      %v787 = vmul.f32 %v764, %v786
      %vm788 = vcmp.eq.f32.partialorder %v764, inf
      %v789 = vsel %vm788, %v764, %v787
      %vm790 = vcmp.eq.f32.partialorder %v764, 0.0
      %v791 = vand.u32 %v764, 2147483648
      %v792 = vsel %vm790, %v791, %v789
      %v793 = vsub.f32 1.0, %v771
      %v794 = vsub.f32 1.0, %v778
      %v795 = vsub.f32 1.0, %v785
      %v796 = vsub.f32 1.0, %v792
      %v797 = vmax.f32 %v793, 0.0
      %v798 = vmax.f32 %v794, 0.0
      %v799 = vmax.f32 %v795, 0.0
      %v800 = vmax.f32 %v796, 0.0
      %v801 = vsel %vm579, %v797, 0.0
      %v802 = vsel %vm579, %v798, 0.0
      %v803 = vadd.f32 %v801, %v802
      %v804 = vsel %vm579, %v799, 0.0
      %v805 = vadd.f32 %v803, %v804
      %v806 = vsel %vm579, %v800, 0.0
      %v807 = vadd.f32 %v805, %v806
      %808 = vadd.xlane.f32.xlu0 %v807
      %v809 = vpop.xlane.xlu0 %808
      %v810 = vrot.slane %v809, 4
      %v811 = vadd.f32 %v809, %v810
      %v812 = vrot.slane %v811, 2
      %v813 = vadd.f32 %v811, %v812
      %v814 = vrot.slane %v813, 1
      %v815 = vadd.f32 %v813, %v814
      %s816 = vtos %v815
      %s817 = sadd.f32 %s816, 0.0
      %s818 = smul.f32 %s817, 0.03125
      %s819 = ssub.f32 %s723, %s760
      %s820 = smul.f32 %s819, 0.03125
      %s821 = sadd.f32 %s654, %s818
      %s822 = smul.f32 %s821, 0.5
      %s823 = sadd.f32 %s656, %s820
      %s824 = smul.f32 %s823, 0.5
      %v825 = vld [vmem:[#allocation6] sm:$0x1]
      %v826 = vsel %vm359, %v825, 0.0
      %827 = vadd.xlane.f32.xlu0 %v826
      %v828 = vpop.xlane.xlu0 %827
      %v829 = vrot.slane %v828, 4
      %v830 = vadd.f32 %v828, %v829
      %v831 = vrot.slane %v830, 2
      %v832 = vadd.f32 %v830, %v831
      %v833 = vrot.slane %v832, 1
      %v834 = vadd.f32 %v832, %v833
      %s835 = vtos %v834
      %s836 = smul.f32 %s835, 0.00390625
      %s837 = sadd.f32 %s822, %s836
      %s838 = smul.f32 %s824, 1e-05
      %s839 = sadd.f32 %s837, %s838
      %s840 = scalar_lea.smem [#allocation7], 0
      %841 = sst [smem:[%s840]] %s839
    $region17: #{tpu_custom_call.1} parent=1 // pred_fallthru
      _
    // Predicated region
    $region18: #{tpu_custom_call.1} parent=1 // pred_check
      _
    $region19: #{tpu_custom_call.1} parent=1 // pred_check_branch
      %843 = sbr.rel (0) target = $region21
    $region20: #{tpu_custom_call.1} parent=1 // pred_region
      %s845 = ssub.s32 16, 16
      %846 = vsyncadd [#allocation8], %s845
      %849 = dma.smem_to_hbm [#allocation7], 16, %s2, [#allocation8]
    $region21: #{tpu_custom_call.1} parent=1 // pred_fallthru
      _
    // Predicated region
    $region22: #{tpu_custom_call.1} parent=1 // pred_check
      _
    $region23: #{tpu_custom_call.1} parent=1 // pred_check_branch
      %851 = sbr.rel (0) target = $region25
    $region24: #{tpu_custom_call.1} parent=1 // pred_region
      %852 = dma.done [#allocation8], 16
    $region25: #{tpu_custom_call.1} parent=1 // pred_fallthru
      _
    %853 = sfence
    %854 = vsyncpa [#allocation8], 1

</llo_original>
